<compile_context>
chip_gen: v7x
topology: tpu7x:2x2x1
jax: 0.10.0
libtpu: 0.0.40
codegen_flags: <defaults>
</compile_context>

<pallas_src>
import jax
import jax.numpy as jnp
from jax.experimental import pallas as pl
from jax.experimental.pallas import tpu as pltpu

_MAX_TILE_M = 8192


def _round_up(x: int, n: int) -> int:
    return ((x + n - 1) // n) * n


def _choose_tile_m(m: int) -> int:
    """Pick a sublane-aligned tile: big tiles, but >=2 grid steps for larger M."""
    m8 = max(8, _round_up(m, 8))
    if m8 <= 1024:
        return m8  # tiny problem: a single grid step is fine
    # Halve (rounded up to a multiple of 8) so mid-size inputs still get >=2
    # parallel grid steps (megacore on v7x), capped at _MAX_TILE_M.
    half = _round_up((m8 + 1) // 2, 8)
    return min(_MAX_TILE_M, half)


def _gaussian_rbf_kernel(x_ref, params_ref, out_ref):
    # x_ref:      (tile_m, 1)     float32   flattened distances
    # params_ref: (2, n_rbf)      float32   row 0: offsets, row 1: -0.5/widths**2
    # out_ref:    (tile_m, n_rbf) float32
    x = x_ref[...]                      # (tile_m, 1)
    p = params_ref[...]                 # (2, n_rbf)
    offsets = p[0:1, :]                 # (1, n_rbf)
    coeff = p[1:2, :]                   # (1, n_rbf)
    diff = x - offsets                  # broadcast -> (tile_m, n_rbf)
    out_ref[...] = jnp.exp(coeff * (diff * diff))


def gaussian_rbf_pallas(inputs, offsets, widths):
    """Pallas equivalent of gaussian_rbf(inputs, offsets, widths).

    inputs: arbitrary-shaped float array.
    offsets, widths: shape (n_rbf,).
    Returns: inputs.shape + (n_rbf,), float32.
    """
    orig_shape = inputs.shape
    n_rbf = offsets.shape[0]

    x_flat = inputs.reshape(-1).astype(jnp.float32)
    m = x_flat.shape[0]

    tile_m = _choose_tile_m(m)
    m_pad = _round_up(max(m, 1), tile_m)
    if m_pad != m:
        x_flat = jnp.pad(x_flat, (0, m_pad - m))
    x2d = x_flat.reshape(m_pad, 1)

    offsets_f = offsets.astype(jnp.float32).reshape(1, n_rbf)
    coeff_f = (-0.5 / (widths.astype(jnp.float32) ** 2)).reshape(1, n_rbf)
    params = jnp.concatenate([offsets_f, coeff_f], axis=0)  # (2, n_rbf)

    grid = (m_pad // tile_m,)

    out = pl.pallas_call(
        _gaussian_rbf_kernel,
        out_shape=jax.ShapeDtypeStruct((m_pad, n_rbf), jnp.float32),
        grid_spec=pltpu.PrefetchScalarGridSpec(
            num_scalar_prefetch=0,
            grid=grid,
            in_specs=[
                pl.BlockSpec((tile_m, 1), lambda i: (i, 0)),
                pl.BlockSpec((2, n_rbf), lambda i: (0, 0)),  # grid-invariant params
            ],
            out_specs=pl.BlockSpec((tile_m, n_rbf), lambda i: (i, 0)),
        ),
        compiler_params=pltpu.CompilerParams(
            dimension_semantics=("parallel",),
            vmem_limit_bytes=32 * 1024 * 1024,
        ),
    )(x2d, params)

    out = out[:m]
    return out.reshape(*orig_shape, n_rbf)


class GaussianRBFPallas:
    """Mirror of the PyTorch GaussianRBF module (non-trainable buffers)."""

    def __init__(self, n_rbf: int, cutoff: float, start: float = 0.0):
        assert n_rbf >= 2, "GaussianRBF requires n_rbf >= 2"
        self.n_rbf = n_rbf
        offset = jnp.linspace(start, cutoff, n_rbf, dtype=jnp.float32)
        widths = jnp.abs(offset[1] - offset[0]) * jnp.ones_like(offset)
        self.offsets = offset
        self.widths = widths

    def __call__(self, inputs):
        return gaussian_rbf_pallas(inputs, self.offsets, self.widths)


if __name__ == "__main__":
    key = jax.random.PRNGKey(0)
    n_rbf = 20
    cutoff = 5.0

    module = GaussianRBFPallas(n_rbf=n_rbf, cutoff=cutoff, start=0.0)
    coeff = -0.5 / (module.widths ** 2)

    # Case 1: typical per-edge distances, single grid step.
    k1, k2 = jax.random.split(key)
    inputs1 = jax.random.uniform(k1, (2, 64), dtype=jnp.float32) * cutoff
    out1 = jax.block_until_ready(module(inputs1))
    ref1 = jnp.exp(coeff * (inputs1[..., None] - module.offsets) ** 2)
    assert out1.shape == (2, 64, n_rbf), out1.shape
    assert jnp.allclose(out1, ref1, atol=1e-6), float(jnp.max(jnp.abs(out1 - ref1)))

    # Case 2: slightly larger, exercises the multi-step (>=2) grid path.
    inputs2 = jax.random.uniform(k2, (4, 300), dtype=jnp.float32) * cutoff
    out2 = jax.block_until_ready(module(inputs2))
    ref2 = jnp.exp(coeff * (inputs2[..., None] - module.offsets) ** 2)
    assert out2.shape == (4, 300, n_rbf), out2.shape
    assert jnp.allclose(out2, ref2, atol=1e-6), float(jnp.max(jnp.abs(out2 - ref2)))

    print("KERNEL_OK")
</pallas_src>

<mosaic_0001>
module attributes {stable_mosaic.version = 11 : i64} {
  func.func @_gaussian_rbf_kernel(%arg0: i32, %arg1: memref<128x1xf32, #tpu.memory_space<vmem>>, %arg2: memref<2x20xf32, #tpu.memory_space<vmem>>, %arg3: memref<128x20xf32, #tpu.memory_space<vmem>>) attributes {dimension_semantics = [#tpu.dimension_semantics<parallel>], iteration_bounds = array<i64: 1>, scalar_prefetch = 0 : i64, scratch_operands = 0 : i64, tpu.core_type = #tpu.core_type<tc>, window_params = [{transform_indices = @transform_0, window_bounds = array<i64: 128, 1>}, {pipeline_mode = #tpu.pipeline_mode<synchronous>, transform_indices = @transform_1, window_bounds = array<i64: 2, 20>}, {transform_indices = @transform_2, window_bounds = array<i64: 128, 20>}]} {
    %c0 = arith.constant 0 : index
    %c0_0 = arith.constant 0 : index
    %0 = vector.load %arg1[%c0, %c0_0] : memref<128x1xf32, #tpu.memory_space<vmem>>, vector<128x1xf32>
    %c0_1 = arith.constant 0 : index
    %c0_2 = arith.constant 0 : index
    %1 = vector.load %arg2[%c0_1, %c0_2] : memref<2x20xf32, #tpu.memory_space<vmem>>, vector<2x20xf32>
    %2 = vector.extract_strided_slice %1 {offsets = [0, 0], sizes = [1, 20], strides = [1, 1]} : vector<2x20xf32> to vector<1x20xf32>
    %3 = vector.extract_strided_slice %1 {offsets = [1, 0], sizes = [1, 20], strides = [1, 1]} : vector<2x20xf32> to vector<1x20xf32>
    %4 = vector.broadcast %0 : vector<128x1xf32> to vector<128x20xf32>
    %5 = vector.broadcast %2 : vector<1x20xf32> to vector<128x20xf32>
    %6 = arith.subf %4, %5 : vector<128x20xf32>
    %7 = arith.mulf %6, %6 : vector<128x20xf32>
    %8 = vector.broadcast %3 : vector<1x20xf32> to vector<128x20xf32>
    %9 = arith.mulf %8, %7 : vector<128x20xf32>
    %10 = math.exp %9 : vector<128x20xf32>
    %c0_3 = arith.constant 0 : index
    %c0_4 = arith.constant 0 : index
    %11 = vector.load %arg3[%c0_3, %c0_4] : memref<128x20xf32, #tpu.memory_space<vmem>>, vector<128x20xf32>
    tpu.vector_store %arg3[%c0_3, %c0_4], %10 {strides = array<i32>} : memref<128x20xf32, #tpu.memory_space<vmem>>, vector<128x20xf32>,
    return
  }
  func.func @transform_0(%arg0: i32) -> (i32, i32) {
    %c0_i32 = arith.constant 0 : i32
    %c0_i32_0 = arith.constant 0 : i32
    return %arg0, %c0_i32 : i32, i32
  }
  func.func @transform_1(%arg0: i32) -> (i32, i32) {
    %c0_i32 = arith.constant 0 : i32
    %c0_i32_0 = arith.constant 0 : i32
    %c0_i32_1 = arith.constant 0 : i32
    return %c0_i32, %c0_i32_0 : i32, i32
  }
  func.func @transform_2(%arg0: i32) -> (i32, i32) {
    %c0_i32 = arith.constant 0 : i32
    %c0_i32_0 = arith.constant 0 : i32
    return %arg0, %c0_i32 : i32, i32
  }
}

</mosaic_0001>

<llo_original>
// kernel: tpu_custom_call.1
$region0: #{tpu_custom_call.1}
  #allocation0 [shape = 'u32[]', space=smem, size = 0x4, offset = 0x4, fixed_abs, tag = 'smem constant byte address 0x4 - core index']
  #allocation1 [shape = 'u32[144,128]{1,0:T(1,128)}', space=vmem, size = 0x12000, scoped, tag = 'internal scratch']
  %s0 = inlined_call_operand.vmem [shape: f32[128,1], index: 0, kind: input, shape index: {}]
  %s1 = inlined_call_operand.vmem [shape: f32[2,20], index: 1, kind: input, shape index: {}]
  %s2 = inlined_call_operand.vmem [shape: f32[128,20], index: 2, kind: output, shape index: {}]
  %s3 = sld [smem:[#allocation0]]
  $region18: #{tpu_custom_call.1} parent=0
    _
  %s5 = ssub.s32 1, %s3
  %s6 = scalar_select 0, %s5, %s3
  // Predicated region
  $region2: #{tpu_custom_call.1} parent=0 // pred_check
    _
  $region3: #{tpu_custom_call.1} parent=0 // pred_check_branch
    %8 = sbr.rel (0) target = $region5
  $region4: #{tpu_custom_call.1} parent=0 // pred_region
    _
  $region5: #{tpu_custom_call.1} parent=0 // pred_fallthru
    _
  // Predicated region
  $region6: #{tpu_custom_call.1} parent=0 // pred_check
    _
  $region7: #{tpu_custom_call.1} parent=0 // pred_check_branch
    %10 = sbr.rel (0) target = $region9
  $region8: #{tpu_custom_call.1} parent=0 // pred_region
    _
  $region9: #{tpu_custom_call.1} parent=0 // pred_fallthru
    _
  %v11 = vld [vmem:[%s0] sm:$0xff]
  %v12 = vld [vmem:[%s0 + $0x8] sm:$0xff]
  %v13 = vld [vmem:[%s0 + $0x10] sm:$0xff]
  %v14 = vld [vmem:[%s0 + $0x18] sm:$0xff]
  %v15 = vld [vmem:[%s0 + $0x20] sm:$0xff]
  %v16 = vld [vmem:[%s0 + $0x28] sm:$0xff]
  %v17 = vld [vmem:[%s0 + $0x30] sm:$0xff]
  %v18 = vld [vmem:[%s0 + $0x38] sm:$0xff]
  %v19 = vld [vmem:[%s0 + $0x40] sm:$0xff]
  %v20 = vld [vmem:[%s0 + $0x48] sm:$0xff]
  %v21 = vld [vmem:[%s0 + $0x50] sm:$0xff]
  %v22 = vld [vmem:[%s0 + $0x58] sm:$0xff]
  %v23 = vld [vmem:[%s0 + $0x60] sm:$0xff]
  %v24 = vld [vmem:[%s0 + $0x68] sm:$0xff]
  %v25 = vld [vmem:[%s0 + $0x70] sm:$0xff]
  %v26 = vld [vmem:[%s0 + $0x78] sm:$0xff]
  %v27 = vld [vmem:[%s1] sm:$0x3]
  %29 = vset.pattern.permute.xlu0 0
  %30 = vperm.xlu0 %29, %v11
  %v31 = vpop.permute.xlu0 %30
  %34 = vset.pattern.permute.xlu0 0
  %35 = vperm.xlu0 %34, %v12
  %v36 = vpop.permute.xlu0 %35
  %39 = vset.pattern.permute.xlu0 0
  %40 = vperm.xlu0 %39, %v13
  %v41 = vpop.permute.xlu0 %40
  %44 = vset.pattern.permute.xlu0 0
  %45 = vperm.xlu0 %44, %v14
  %v46 = vpop.permute.xlu0 %45
  %49 = vset.pattern.permute.xlu0 0
  %50 = vperm.xlu0 %49, %v15
  %v51 = vpop.permute.xlu0 %50
  %54 = vset.pattern.permute.xlu0 0
  %55 = vperm.xlu0 %54, %v16
  %v56 = vpop.permute.xlu0 %55
  %59 = vset.pattern.permute.xlu0 0
  %60 = vperm.xlu0 %59, %v17
  %v61 = vpop.permute.xlu0 %60
  %64 = vset.pattern.permute.xlu0 0
  %65 = vperm.xlu0 %64, %v18
  %v66 = vpop.permute.xlu0 %65
  %69 = vset.pattern.permute.xlu0 0
  %70 = vperm.xlu0 %69, %v19
  %v71 = vpop.permute.xlu0 %70
  %74 = vset.pattern.permute.xlu0 0
  %75 = vperm.xlu0 %74, %v20
  %v76 = vpop.permute.xlu0 %75
  %79 = vset.pattern.permute.xlu0 0
  %80 = vperm.xlu0 %79, %v21
  %v81 = vpop.permute.xlu0 %80
  %84 = vset.pattern.permute.xlu0 0
  %85 = vperm.xlu0 %84, %v22
  %v86 = vpop.permute.xlu0 %85
  %89 = vset.pattern.permute.xlu0 0
  %90 = vperm.xlu0 %89, %v23
  %v91 = vpop.permute.xlu0 %90
  %94 = vset.pattern.permute.xlu0 0
  %95 = vperm.xlu0 %94, %v24
  %v96 = vpop.permute.xlu0 %95
  %99 = vset.pattern.permute.xlu0 0
  %100 = vperm.xlu0 %99, %v25
  %v101 = vpop.permute.xlu0 %100
  %104 = vset.pattern.permute.xlu0 0
  %105 = vperm.xlu0 %104, %v26
  %v106 = vpop.permute.xlu0 %105
  %v108 = vlaneseq
  %v109 = vshrl.u32 %v108, 7
  %v110 = vsub.s32 0, %v109
  %v111 = vrot.slane %v27, %v110
  %v112 = vsub.f32 %v31, %v111
  %v113 = vsub.f32 %v36, %v111
  %v114 = vsub.f32 %v41, %v111
  %v115 = vsub.f32 %v46, %v111
  %v116 = vsub.f32 %v51, %v111
  %v117 = vsub.f32 %v56, %v111
  %v118 = vsub.f32 %v61, %v111
  %v119 = vsub.f32 %v66, %v111
  %v120 = vsub.f32 %v71, %v111
  %v121 = vsub.f32 %v76, %v111
  %v122 = vsub.f32 %v81, %v111
  %v123 = vsub.f32 %v86, %v111
  %v124 = vsub.f32 %v91, %v111
  %v125 = vsub.f32 %v96, %v111
  %v126 = vsub.f32 %v101, %v111
  %v127 = vsub.f32 %v106, %v111
  %v128 = vmul.f32 %v112, %v112
  %v129 = vmul.f32 %v113, %v113
  %v130 = vmul.f32 %v114, %v114
  %v131 = vmul.f32 %v115, %v115
  %v132 = vmul.f32 %v116, %v116
  %v133 = vmul.f32 %v117, %v117
  %v134 = vmul.f32 %v118, %v118
  %v135 = vmul.f32 %v119, %v119
  %v136 = vmul.f32 %v120, %v120
  %v137 = vmul.f32 %v121, %v121
  %v138 = vmul.f32 %v122, %v122
  %v139 = vmul.f32 %v123, %v123
  %v140 = vmul.f32 %v124, %v124
  %v141 = vmul.f32 %v125, %v125
  %v142 = vmul.f32 %v126, %v126
  %v143 = vmul.f32 %v127, %v127
  %v144 = vlaneseq
  %v145 = vshrl.u32 %v144, 7
  %v146 = vsub.s32 1, %v145
  %v147 = vrot.slane %v27, %v146
  %v148 = vmul.f32 %v147, %v128
  %v149 = vmul.f32 %v147, %v129
  %v150 = vmul.f32 %v147, %v130
  %v151 = vmul.f32 %v147, %v131
  %v152 = vmul.f32 %v147, %v132
  %v153 = vmul.f32 %v147, %v133
  %v154 = vmul.f32 %v147, %v134
  %v155 = vmul.f32 %v147, %v135
  %v156 = vmul.f32 %v147, %v136
  %v157 = vmul.f32 %v147, %v137
  %v158 = vmul.f32 %v147, %v138
  %v159 = vmul.f32 %v147, %v139
  %v160 = vmul.f32 %v147, %v140
  %v161 = vmul.f32 %v147, %v141
  %v162 = vmul.f32 %v147, %v142
  %v163 = vmul.f32 %v147, %v143
  %v164 = vmul.f32 %v148, 1.442695
  %v165 = vpow.pop %v164
  %v166 = vmul.f32 %v149, 1.442695
  %v167 = vpow.pop %v166
  %v168 = vmul.f32 %v150, 1.442695
  %v169 = vpow.pop %v168
  %v170 = vmul.f32 %v151, 1.442695
  %v171 = vpow.pop %v170
  %v172 = vmul.f32 %v152, 1.442695
  %v173 = vpow.pop %v172
  %v174 = vmul.f32 %v153, 1.442695
  %v175 = vpow.pop %v174
  %v176 = vmul.f32 %v154, 1.442695
  %v177 = vpow.pop %v176
  %v178 = vmul.f32 %v155, 1.442695
  %v179 = vpow.pop %v178
  %v180 = vmul.f32 %v156, 1.442695
  %v181 = vpow.pop %v180
  %v182 = vmul.f32 %v157, 1.442695
  %v183 = vpow.pop %v182
  %v184 = vmul.f32 %v158, 1.442695
  %v185 = vpow.pop %v184
  %v186 = vmul.f32 %v159, 1.442695
  %v187 = vpow.pop %v186
  %v188 = vmul.f32 %v160, 1.442695
  %v189 = vpow.pop %v188
  %v190 = vmul.f32 %v161, 1.442695
  %v191 = vpow.pop %v190
  %v192 = vmul.f32 %v162, 1.442695
  %v193 = vpow.pop %v192
  %v194 = vmul.f32 %v163, 1.442695
  %v195 = vpow.pop %v194
  %vm196 = vcmask 162816
  %197 = vst.msk [vmem:[%s2] sm:$0xff] %vm196, %v165
  %198 = vst.msk [vmem:[%s2 + $0x8] sm:$0xff] %vm196, %v167
  %199 = vst.msk [vmem:[%s2 + $0x10] sm:$0xff] %vm196, %v169
  %200 = vst.msk [vmem:[%s2 + $0x18] sm:$0xff] %vm196, %v171
  %201 = vst.msk [vmem:[%s2 + $0x20] sm:$0xff] %vm196, %v173
  %202 = vst.msk [vmem:[%s2 + $0x28] sm:$0xff] %vm196, %v175
  %203 = vst.msk [vmem:[%s2 + $0x30] sm:$0xff] %vm196, %v177
  %204 = vst.msk [vmem:[%s2 + $0x38] sm:$0xff] %vm196, %v179
  %205 = vst.msk [vmem:[%s2 + $0x40] sm:$0xff] %vm196, %v181
  %206 = vst.msk [vmem:[%s2 + $0x48] sm:$0xff] %vm196, %v183
  %207 = vst.msk [vmem:[%s2 + $0x50] sm:$0xff] %vm196, %v185
  %208 = vst.msk [vmem:[%s2 + $0x58] sm:$0xff] %vm196, %v187
  %209 = vst.msk [vmem:[%s2 + $0x60] sm:$0xff] %vm196, %v189
  %210 = vst.msk [vmem:[%s2 + $0x68] sm:$0xff] %vm196, %v191
  %211 = vst.msk [vmem:[%s2 + $0x70] sm:$0xff] %vm196, %v193
  %212 = vst.msk [vmem:[%s2 + $0x78] sm:$0xff] %vm196, %v195
  // Predicated region
  $region10: #{tpu_custom_call.1} parent=0 // pred_check
    _
  $region11: #{tpu_custom_call.1} parent=0 // pred_check_branch
    %214 = sbr.rel (0) target = $region13
  $region12: #{tpu_custom_call.1} parent=0 // pred_region
    _
  $region13: #{tpu_custom_call.1} parent=0 // pred_fallthru
    _
  // Predicated region
  $region14: #{tpu_custom_call.1} parent=0 // pred_check
    _
  $region15: #{tpu_custom_call.1} parent=0 // pred_check_branch
    %216 = sbr.rel (0) target = $region17
  $region16: #{tpu_custom_call.1} parent=0 // pred_region
    _
  $region17: #{tpu_custom_call.1} parent=0 // pred_fallthru
    _

</llo_original>
